<compile_context>
chip_gen: v7x
topology: tpu7x:2x2x1
jax: 0.10.0
libtpu: 0.0.40
codegen_flags: <defaults>
</compile_context>

<pallas_src>
import jax
import jax.numpy as jnp
from jax import lax
from jax.experimental import pallas as pl
from jax.experimental.pallas import tpu as pltpu

# ---- synthetic model configuration (small shapes) ----
B, C_IN, H, W = 2, 3, 16, 16
C_OUT = 8
K = 3                    # 3x3 conv, padding=1, stride=1
N_GAZE = 2               # (yaw, pitch)
N_IMG = 2 * B            # both eyes stacked along batch: [left 0..B-1 ; right B..2B-1]
HW = H * W               # 256 spatial positions per image
R = N_IMG * HW           # 1024 im2col rows (spatial positions of all images)
KC = K * K * C_IN        # 27 im2col columns (kh, kw, cin)
KCB = KC + 1             # 28: conv bias folded in via a ones-row
P_LANES = 128            # packed parameter slab width (one lane-dense vreg row)


# ---------------------------------------------------------------------------
# Single fused kernel: conv(both eyes)+bias+ReLU (one MXU matmul),
# global-avg-pool (4 lane-slice reductions), FC head (VPU mul + sublane sum).
# Only two input DMAs: the im2col slab and the packed parameter slab.
# ---------------------------------------------------------------------------
def fused_gaze_kernel(cols_ref, slab_ref, o_ref):
    # cols_ref : (KCB, R) = (28, 1024)  im2col of both eyes (+ ones row), channel-major
    # slab_ref : (C_OUT, 128)           packed params
    #            [:, 0:KCB]                        conv weight (+bias col) transposed
    #            [:, KCB:KCB+N_GAZE]                FC weight, left-eye half
    #            [:, KCB+N_GAZE:KCB+2*N_GAZE]       FC weight, right-eye half
    #            [0:1, KCB+2*N_GAZE:KCB+3*N_GAZE]   FC bias (row)
    # o_ref    : (B, N_GAZE) = (2, 2)

    p = slab_ref[...]
    wconv_t = p[:, 0:KCB]                                    # (C_OUT, KCB)
    wfc_l = p[:, KCB:KCB + N_GAZE]                           # (C_OUT, N_GAZE)
    wfc_r = p[:, KCB + N_GAZE:KCB + 2 * N_GAZE]              # (C_OUT, N_GAZE)
    bfc = p[0:1, KCB + 2 * N_GAZE:KCB + 3 * N_GAZE]          # (1, N_GAZE)

    # 3x3 conv (+bias) of all 4 images as ONE MXU matmul; lane-dense (8, 1024).
    act = jnp.dot(wconv_t, cols_ref[...],
                  preferred_element_type=jnp.float32)        # (C_OUT, R)
    act = jnp.maximum(act, 0.0)                              # ReLU

    # Global average pool per image: static, 128-aligned lane-slice reductions.
    inv_hw = 1.0 / HW
    pooled = [jnp.sum(act[:, i * HW:(i + 1) * HW], axis=-1, keepdims=True) * inv_hw
              for i in range(N_IMG)]                         # N_IMG x (C_OUT, 1)

    # FC head on VPU/XLU: concat(left, right) @ w_fc realized as two split
    # contractions (broadcast-mul + sublane reduce), no tiny MXU matmuls.
    rows = []
    for b in range(B):
        row = (jnp.sum(wfc_l * pooled[b], axis=0, keepdims=True)
               + jnp.sum(wfc_r * pooled[B + b], axis=0, keepdims=True)
               + bfc)                                        # (1, N_GAZE)
        rows.append(row)
    o_ref[...] = jnp.concatenate(rows, axis=0)               # (B, N_GAZE)


def _fused_gaze_call(cols, slab):
    return pl.pallas_call(
        fused_gaze_kernel,
        out_shape=jax.ShapeDtypeStruct((B, N_GAZE), jnp.float32),
        grid=(1,),
        in_specs=[
            pl.BlockSpec((KCB, R), lambda i: (0, 0)),
            pl.BlockSpec((C_OUT, P_LANES), lambda i: (0, 0)),
        ],
        out_specs=pl.BlockSpec((B, N_GAZE), lambda i: (0, 0)),
    )(cols, slab)


# ---------------------------------------------------------------------------
# ONNXCompatibleModel.forward equivalent: takes NCHW left/right eye images.
# Wrapper does only layout plumbing (channel-major pad / im2col built directly
# in (KC, R) order / parameter packing); all compute is in the Pallas kernel.
# ---------------------------------------------------------------------------
@jax.jit
def onnx_compatible_forward(left_eye, right_eye, params):
    # dict packing of the original wrapper is pure Python glue.
    batch = {"left_eye": left_eye, "right_eye": right_eye}
    w_conv, b_conv, w_fc, b_fc = params

    # Stack both eyes along batch so the shared conv weight is applied once.
    x = jnp.concatenate([batch["left_eye"], batch["right_eye"]], axis=0)  # (2B,C,H,W)
    x_cm = jnp.transpose(x, (1, 0, 2, 3))                                 # (C,2B,H,W)
    xp = jnp.pad(x_cm, ((0, 0), (0, 0), (1, 1), (1, 1)))                  # (C,2B,H+2,W+2)

    # im2col directly in channel-major (KC, R) order; row order (kh, kw, cin)
    # matches the HWIO weight reshape below.  No trailing transpose.
    taps = [xp[:, :, kh:kh + H, kw:kw + W].reshape(C_IN, R)
            for kh in range(K) for kw in range(K)]
    cols = jnp.concatenate(taps + [jnp.ones((1, R), jnp.float32)], axis=0)  # (KCB, R)

    # One packed, lane-dense parameter slab (zero-padded to (C_OUT, 128)).
    wconv_kcb = jnp.concatenate(
        [w_conv.reshape(KC, C_OUT), b_conv.reshape(1, C_OUT)], axis=0)      # (KCB, C_OUT)
    slab = jnp.zeros((C_OUT, P_LANES), jnp.float32)
    slab = slab.at[:, 0:KCB].set(wconv_kcb.T)
    slab = slab.at[:, KCB:KCB + N_GAZE].set(w_fc[:C_OUT, :])
    slab = slab.at[:, KCB + N_GAZE:KCB + 2 * N_GAZE].set(w_fc[C_OUT:, :])
    slab = slab.at[0:1, KCB + 2 * N_GAZE:KCB + 3 * N_GAZE].set(
        b_fc.reshape(1, N_GAZE))

    return _fused_gaze_call(cols, slab)                                     # (B, N_GAZE)


# ---------------------------------------------------------------------------
# Pure-JAX reference for correctness checking.
# ---------------------------------------------------------------------------
def reference_forward(left_eye, right_eye, params):
    w_conv, b_conv, w_fc, b_fc = params

    def branch(x_nchw):
        x = jnp.transpose(x_nchw, (0, 2, 3, 1))
        y = lax.conv_general_dilated(
            x, w_conv, window_strides=(1, 1), padding="SAME",
            dimension_numbers=("NHWC", "HWIO", "NHWC"))
        y = jnp.maximum(y + b_conv[0], 0.0)
        return jnp.mean(y, axis=(1, 2))

    feat = jnp.concatenate([branch(left_eye), branch(right_eye)], axis=-1)
    return feat @ w_fc + b_fc


if __name__ == "__main__":
    key = jax.random.PRNGKey(0)
    k1, k2, k3, k4, k5, k6 = jax.random.split(key, 6)

    # deterministic inputs (NCHW, matching PyTorch convention)
    left_eye = jax.random.normal(k1, (B, C_IN, H, W), jnp.float32)
    right_eye = jax.random.normal(k2, (B, C_IN, H, W), jnp.float32)

    # deterministic synthetic parameters
    w_conv = 0.1 * jax.random.normal(k3, (K, K, C_IN, C_OUT), jnp.float32)
    b_conv = 0.01 * jax.random.normal(k4, (1, C_OUT), jnp.float32)
    w_fc = 0.1 * jax.random.normal(k5, (2 * C_OUT, N_GAZE), jnp.float32)
    b_fc = 0.01 * jax.random.normal(k6, (1, N_GAZE), jnp.float32)
    params = (w_conv, b_conv, w_fc, b_fc)

    out = onnx_compatible_forward(left_eye, right_eye, params)
    out = jax.block_until_ready(out)

    ref = reference_forward(left_eye, right_eye, params)
    assert out.shape == (B, N_GAZE)
    assert jnp.allclose(out, ref, atol=1e-4, rtol=1e-4), (out, ref)

    print("KERNEL_OK")
</pallas_src>

<mosaic_0001>
module attributes {stable_mosaic.version = 11 : i64} {
  func.func @fused_gaze_kernel(%arg0: i32, %arg1: memref<28x1024xf32, #tpu.memory_space<vmem>>, %arg2: memref<8x128xf32, #tpu.memory_space<vmem>>, %arg3: memref<2x2xf32, #tpu.memory_space<vmem>>) attributes {dimension_semantics = [#tpu.dimension_semantics<arbitrary>], iteration_bounds = array<i64: 1>, scalar_prefetch = 0 : i64, scratch_operands = 0 : i64, tpu.core_type = #tpu.core_type<tc>, window_params = [{pipeline_mode = #tpu.pipeline_mode<synchronous>, transform_indices = @transform_0, window_bounds = array<i64: 28, 1024>}, {pipeline_mode = #tpu.pipeline_mode<synchronous>, transform_indices = @transform_1, window_bounds = array<i64: 8, 128>}, {pipeline_mode = #tpu.pipeline_mode<synchronous>, transform_indices = @transform_2, window_bounds = array<i64: 2, 2>}]} {
    %c0 = arith.constant 0 : index
    %c0_0 = arith.constant 0 : index
    %0 = vector.load %arg2[%c0, %c0_0] : memref<8x128xf32, #tpu.memory_space<vmem>>, vector<8x128xf32>
    %1 = vector.extract_strided_slice %0 {offsets = [0, 0], sizes = [8, 28], strides = [1, 1]} : vector<8x128xf32> to vector<8x28xf32>
    %2 = vector.extract_strided_slice %0 {offsets = [0, 28], sizes = [8, 2], strides = [1, 1]} : vector<8x128xf32> to vector<8x2xf32>
    %3 = vector.extract_strided_slice %0 {offsets = [0, 30], sizes = [8, 2], strides = [1, 1]} : vector<8x128xf32> to vector<8x2xf32>
    %4 = vector.extract_strided_slice %0 {offsets = [0, 32], sizes = [1, 2], strides = [1, 1]} : vector<8x128xf32> to vector<1x2xf32>
    %c0_1 = arith.constant 0 : index
    %c0_2 = arith.constant 0 : index
    %5 = vector.load %arg1[%c0_1, %c0_2] : memref<28x1024xf32, #tpu.memory_space<vmem>>, vector<28x1024xf32>
    %cst = arith.constant dense<0.000000e+00> : vector<8x1024xf32>
    %6 = tpu.matmul %1, %5, %cst {dimension_numbers = #tpu.dot_dimension_numbers<[1], [0], [0], [1], [0, 0, 1, 1], [], []>} : vector<8x28xf32>, vector<28x1024xf32>, vector<8x1024xf32> -> vector<8x1024xf32>
    %cst_3 = arith.constant 0.000000e+00 : f32
    %7 = vector.broadcast %cst_3 : f32 to vector<8x1024xf32>
    %8 = arith.maximumf %6, %7 : vector<8x1024xf32>
    %9 = vector.extract_strided_slice %8 {offsets = [0, 0], sizes = [8, 256], strides = [1, 1]} : vector<8x1024xf32> to vector<8x256xf32>
    %cst_4 = arith.constant dense<0.000000e+00> : vector<8xf32>
    %10 = vector.multi_reduction <add>, %9, %cst_4 [1] : vector<8x256xf32> to vector<8xf32>
    %11 = vector.shape_cast %10 : vector<8xf32> to vector<8x1xf32>
    %cst_5 = arith.constant 3.906250e-03 : f32
    %12 = vector.broadcast %cst_5 : f32 to vector<8x1xf32>
    %13 = arith.mulf %11, %12 : vector<8x1xf32>
    %14 = vector.extract_strided_slice %8 {offsets = [0, 256], sizes = [8, 256], strides = [1, 1]} : vector<8x1024xf32> to vector<8x256xf32>
    %cst_6 = arith.constant dense<0.000000e+00> : vector<8xf32>
    %15 = vector.multi_reduction <add>, %14, %cst_6 [1] : vector<8x256xf32> to vector<8xf32>
    %16 = vector.shape_cast %15 : vector<8xf32> to vector<8x1xf32>
    %cst_7 = arith.constant 3.906250e-03 : f32
    %17 = vector.broadcast %cst_7 : f32 to vector<8x1xf32>
    %18 = arith.mulf %16, %17 : vector<8x1xf32>
    %19 = vector.extract_strided_slice %8 {offsets = [0, 512], sizes = [8, 256], strides = [1, 1]} : vector<8x1024xf32> to vector<8x256xf32>
    %cst_8 = arith.constant dense<0.000000e+00> : vector<8xf32>
    %20 = vector.multi_reduction <add>, %19, %cst_8 [1] : vector<8x256xf32> to vector<8xf32>
    %21 = vector.shape_cast %20 : vector<8xf32> to vector<8x1xf32>
    %cst_9 = arith.constant 3.906250e-03 : f32
    %22 = vector.broadcast %cst_9 : f32 to vector<8x1xf32>
    %23 = arith.mulf %21, %22 : vector<8x1xf32>
    %24 = vector.extract_strided_slice %8 {offsets = [0, 768], sizes = [8, 256], strides = [1, 1]} : vector<8x1024xf32> to vector<8x256xf32>
    %cst_10 = arith.constant dense<0.000000e+00> : vector<8xf32>
    %25 = vector.multi_reduction <add>, %24, %cst_10 [1] : vector<8x256xf32> to vector<8xf32>
    %26 = vector.shape_cast %25 : vector<8xf32> to vector<8x1xf32>
    %cst_11 = arith.constant 3.906250e-03 : f32
    %27 = vector.broadcast %cst_11 : f32 to vector<8x1xf32>
    %28 = arith.mulf %26, %27 : vector<8x1xf32>
    %29 = vector.broadcast %13 : vector<8x1xf32> to vector<8x2xf32>
    %30 = arith.mulf %2, %29 : vector<8x2xf32>
    %cst_12 = arith.constant dense<0.000000e+00> : vector<2xf32>
    %31 = vector.multi_reduction <add>, %30, %cst_12 [0] : vector<8x2xf32> to vector<2xf32>
    %32 = vector.shape_cast %31 : vector<2xf32> to vector<1x2xf32>
    %33 = vector.broadcast %23 : vector<8x1xf32> to vector<8x2xf32>
    %34 = arith.mulf %3, %33 : vector<8x2xf32>
    %cst_13 = arith.constant dense<0.000000e+00> : vector<2xf32>
    %35 = vector.multi_reduction <add>, %34, %cst_13 [0] : vector<8x2xf32> to vector<2xf32>
    %36 = vector.shape_cast %35 : vector<2xf32> to vector<1x2xf32>
    %37 = arith.addf %32, %36 : vector<1x2xf32>
    %38 = arith.addf %37, %4 : vector<1x2xf32>
    %39 = vector.broadcast %18 : vector<8x1xf32> to vector<8x2xf32>
    %40 = arith.mulf %2, %39 : vector<8x2xf32>
    %cst_14 = arith.constant dense<0.000000e+00> : vector<2xf32>
    %41 = vector.multi_reduction <add>, %40, %cst_14 [0] : vector<8x2xf32> to vector<2xf32>
    %42 = vector.shape_cast %41 : vector<2xf32> to vector<1x2xf32>
    %43 = vector.broadcast %28 : vector<8x1xf32> to vector<8x2xf32>
    %44 = arith.mulf %3, %43 : vector<8x2xf32>
    %cst_15 = arith.constant dense<0.000000e+00> : vector<2xf32>
    %45 = vector.multi_reduction <add>, %44, %cst_15 [0] : vector<8x2xf32> to vector<2xf32>
    %46 = vector.shape_cast %45 : vector<2xf32> to vector<1x2xf32>
    %47 = arith.addf %42, %46 : vector<1x2xf32>
    %48 = arith.addf %47, %4 : vector<1x2xf32>
    %49 = tpu.concatenate %38, %48 in 0 : vector<1x2xf32>, vector<1x2xf32> -> vector<2x2xf32>
    %c0_16 = arith.constant 0 : index
    %c0_17 = arith.constant 0 : index
    %50 = vector.load %arg3[%c0_16, %c0_17] : memref<2x2xf32, #tpu.memory_space<vmem>>, vector<2x2xf32>
    tpu.vector_store %arg3[%c0_16, %c0_17], %49 {strides = array<i32>} : memref<2x2xf32, #tpu.memory_space<vmem>>, vector<2x2xf32>,
    return
  }
  func.func @transform_0(%arg0: i32) -> (i32, i32) {
    %c0_i32 = arith.constant 0 : i32
    %c0_i32_0 = arith.constant 0 : i32
    %c0_i32_1 = arith.constant 0 : i32
    return %c0_i32, %c0_i32_0 : i32, i32
  }
  func.func @transform_1(%arg0: i32) -> (i32, i32) {
    %c0_i32 = arith.constant 0 : i32
    %c0_i32_0 = arith.constant 0 : i32
    %c0_i32_1 = arith.constant 0 : i32
    return %c0_i32, %c0_i32_0 : i32, i32
  }
  func.func @transform_2(%arg0: i32) -> (i32, i32) {
    %c0_i32 = arith.constant 0 : i32
    %c0_i32_0 = arith.constant 0 : i32
    %c0_i32_1 = arith.constant 0 : i32
    return %c0_i32, %c0_i32_0 : i32, i32
  }
}

</mosaic_0001>

<llo_original>
// kernel: onnx_compatible_forward.1
$region0: #{onnx_compatible_forward.1}
  #allocation0 [shape = 'u32[]', space=smem, size = 0x4, offset = 0x4, fixed_abs, tag = 'smem constant byte address 0x4 - core index']
  #allocation1 [shape = 'u32[144,128]{1,0:T(1,128)}', space=vmem, size = 0x12000, scoped, tag = 'internal scratch']
  %s0 = inlined_call_operand.vmem [shape: f32[28,1024], index: 0, kind: input, shape index: {}]
  %s1 = inlined_call_operand.vmem [shape: f32[8,128], index: 1, kind: input, shape index: {}]
  %s2 = inlined_call_operand.hbm [shape: f32[2,2], index: 2, kind: output, shape index: {}]
  %s3 = sld [smem:[#allocation0]]
  $region18: #{onnx_compatible_forward.1} parent=0
    _
  %s5 = ssub.s32 1, %s3
  %s6 = scalar_select 0, %s5, %s3
  $region1: #{onnx_compatible_forward.1} parent=0
    #allocation2 [shape = 'u8[1024]{0}', space=vmem, size = 0x400, scoped, tag = 'output window, operand 0, single buffered']
    #allocation3 [shape = 's32[1]{0}', space=sflag, size = 0x4, scoped, tag = 'scoped memory for onnx_compatible_forward.1']
    %7 = vsyncpa [#allocation3], 0
    // Predicated region
    $region2: #{onnx_compatible_forward.1} parent=1 // pred_check
      _
    $region3: #{onnx_compatible_forward.1} parent=1 // pred_check_branch
      %9 = sbr.rel (0) target = $region5
    $region4: #{onnx_compatible_forward.1} parent=1 // pred_region
      _
    $region5: #{onnx_compatible_forward.1} parent=1 // pred_fallthru
      _
    // Predicated region
    $region6: #{onnx_compatible_forward.1} parent=1 // pred_check
      _
    $region7: #{onnx_compatible_forward.1} parent=1 // pred_check_branch
      %11 = sbr.rel (0) target = $region9
    $region8: #{onnx_compatible_forward.1} parent=1 // pred_region
      _
    $region9: #{onnx_compatible_forward.1} parent=1 // pred_fallthru
      _
    %v12 = vld [vmem:[%s1] sm:$0xff]
    %v13 = vld [vmem:[%s0] sm:$0xff]
    %v14 = vld [vmem:[%s0 + $0x8] sm:$0xff]
    %v15 = vld [vmem:[%s0 + $0x10] sm:$0xff]
    %v16 = vld [vmem:[%s0 + $0x18] sm:$0xff]
    %v17 = vld [vmem:[%s0 + $0x20] sm:$0xff]
    %v18 = vld [vmem:[%s0 + $0x28] sm:$0xff]
    %v19 = vld [vmem:[%s0 + $0x30] sm:$0xff]
    %v20 = vld [vmem:[%s0 + $0x38] sm:$0xff]
    %v21 = vld [vmem:[%s0 + $0x40] sm:$0xff]
    %v22 = vld [vmem:[%s0 + $0x48] sm:$0xff]
    %v23 = vld [vmem:[%s0 + $0x50] sm:$0xff]
    %v24 = vld [vmem:[%s0 + $0x58] sm:$0xff]
    %v25 = vld [vmem:[%s0 + $0x60] sm:$0xff]
    %v26 = vld [vmem:[%s0 + $0x68] sm:$0xff]
    %v27 = vld [vmem:[%s0 + $0x70] sm:$0xff]
    %v28 = vld [vmem:[%s0 + $0x78] sm:$0xff]
    %v29 = vld [vmem:[%s0 + $0x80] sm:$0xff]
    %v30 = vld [vmem:[%s0 + $0x88] sm:$0xff]
    %v31 = vld [vmem:[%s0 + $0x90] sm:$0xff]
    %v32 = vld [vmem:[%s0 + $0x98] sm:$0xff]
    %v33 = vld [vmem:[%s0 + $0xa0] sm:$0xff]
    %v34 = vld [vmem:[%s0 + $0xa8] sm:$0xff]
    %v35 = vld [vmem:[%s0 + $0xb0] sm:$0xff]
    %v36 = vld [vmem:[%s0 + $0xb8] sm:$0xff]
    %v37 = vld [vmem:[%s0 + $0xc0] sm:$0xf]
    %v38 = vld [vmem:[%s0 + $0xc8] sm:$0xf]
    %v39 = vld [vmem:[%s0 + $0xd0] sm:$0xf]
    %v40 = vld [vmem:[%s0 + $0xd8] sm:$0xf]
    %v41 = vld [vmem:[%s0 + $0xe0] sm:$0xf]
    %v42 = vld [vmem:[%s0 + $0xe8] sm:$0xf]
    %v43 = vld [vmem:[%s0 + $0xf0] sm:$0xf]
    %v44 = vld [vmem:[%s0 + $0xf8] sm:$0xf]
    %vm45 = vcmask 228352
    %v47 = vsel %vm45, %v12, 0
    %vm49 = vcmask 1043456
    %v51 = vsel %vm49, %v37, 0
    %v54 = vsel %vm49, %v38, 0
    %v57 = vsel %vm49, %v39, 0
    %v60 = vsel %vm49, %v40, 0
    %v63 = vsel %vm49, %v41, 0
    %v66 = vsel %vm49, %v42, 0
    %v69 = vsel %vm49, %v43, 0
    %v72 = vsel %vm49, %v44, 0
    %74 = vmatprep.subr.mxu0 %v14
    %75 = vmatpush1.msra.mxu0 %v13
    %76 = vmatprep.subr.mxu0 %v22
    %77 = vmatpush1.msra.mxu0 %v21
    %78 = vmatprep.subr.mxu0 %v30
    %79 = vmatpush1.msra.mxu0 %v29
    %80 = vmatprep.subr.mxu0 %v54
    %81 = vmatpush1.msra.mxu0 %v51
    %82 = vmatprep.subr.mxu0 0.0
    %83 = vmatpush1.msra.mxu0 0.0
    %84 = vmatprep.subr.mxu0 0.0
    %85 = vmatpush1.msra.mxu0 0.0
    %86 = vmatprep.subr.mxu0 0.0
    %87 = vmatpush1.msra.mxu0 0.0
    %88 = vmatprep.subr.mxu0 0.0
    %89 = vmatpush1.msra.mxu0 0.0
    %90 = vmatprep.subr.mxu0 0.0
    %91 = vmatpush1.msra.mxu0 0.0
    %92 = vmatprep.subr.mxu0 0.0
    %93 = vmatpush1.msra.mxu0 0.0
    %94 = vmatprep.subr.mxu0 0.0
    %95 = vmatpush1.msra.mxu0 0.0
    %96 = vmatprep.subr.mxu0 0.0
    %97 = vmatpush1.msra.mxu0 0.0
    %98 = vmatprep.subr.mxu0 0.0
    %99 = vmatpush1.msra.mxu0 0.0
    %100 = vmatprep.subr.mxu0 0.0
    %101 = vmatpush1.msra.mxu0 0.0
    %102 = vmatprep.subr.mxu0 0.0
    %103 = vmatpush1.msra.mxu0 0.0
    %104 = vmatprep.subr.mxu0 0.0
    %105 = vmatpush1.msra.mxu0 0.0
    %106 = vmatprep.subr.mxu0 0.0
    %107 = vmatpush1.msra.mxu0 0.0
    %108 = vmatprep.subr.mxu0 0.0
    %109 = vmatpush1.msra.mxu0 0.0
    %110 = vmatprep.subr.mxu0 0.0
    %111 = vmatpush1.msra.mxu0 0.0
    %112 = vmatprep.subr.mxu0 0.0
    %113 = vmatpush1.msra.mxu0 0.0
    %114 = vmatprep.subr.mxu0 0.0
    %115 = vmatpush1.msra.mxu0 0.0
    %116 = vmatprep.subr.mxu0 0.0
    %117 = vmatpush1.msra.mxu0 0.0
    %118 = vmatprep.subr.mxu0 0.0
    %119 = vmatpush1.msra.mxu0 0.0
    %120 = vmatprep.subr.mxu0 0.0
    %121 = vmatpush1.msra.mxu0 0.0
    %122 = vmatprep.subr.mxu0 0.0
    %123 = vmatpush1.msra.mxu0 0.0
    %124 = vmatprep.subr.mxu0 0.0
    %125 = vmatpush1.msra.mxu0 0.0
    %126 = vmatprep.subr.mxu0 0.0
    %127 = vmatpush1.msra.mxu0 0.0
    %128 = vmatprep.subr.mxu0 0.0
    %129 = vmatpush1.msra.mxu0 0.0
    %130 = vmatprep.subr.mxu0 0.0
    %131 = vmatpush1.msra.mxu0 0.0
    %132 = vmatprep.subr.mxu0 0.0
    %133 = vmatpush1.msra.mxu0 0.0
    %134 = vmatprep.subr.mxu0 0.0
    %135 = vmatpush1.msra.mxu0 0.0
    %136 = vmatprep.subr.mxu0 0.0
    %137 = vmatpush1.msra.mxu0 0.0
    %138 = vmatprep.mubr.f32.mxu0 0.0
    %139 = vmatmul.mubr.f32.gmra.mrb[0].mxu0 %v47
    %v140 = vpop.f32.mrb[0].mxu0
    %v141 = vadd.f32 0.0, %v140
    %v142 = vpop.f32.mrb[0].mxu0
    %v143 = vadd.f32 0.0, %v142
    %144 = vdwg.mxu0
    %145 = vmatprep.subr.mxu0 %v16
    %146 = vmatpush1.msra.mxu0 %v15
    %147 = vmatprep.subr.mxu0 %v24
    %148 = vmatpush1.msra.mxu0 %v23
    %149 = vmatprep.subr.mxu0 %v32
    %150 = vmatpush1.msra.mxu0 %v31
    %151 = vmatprep.subr.mxu0 %v60
    %152 = vmatpush1.msra.mxu0 %v57
    %153 = vmatprep.subr.mxu0 0.0
    %154 = vmatpush1.msra.mxu0 0.0
    %155 = vmatprep.subr.mxu0 0.0
    %156 = vmatpush1.msra.mxu0 0.0
    %157 = vmatprep.subr.mxu0 0.0
    %158 = vmatpush1.msra.mxu0 0.0
    %159 = vmatprep.subr.mxu0 0.0
    %160 = vmatpush1.msra.mxu0 0.0
    %161 = vmatprep.subr.mxu0 0.0
    %162 = vmatpush1.msra.mxu0 0.0
    %163 = vmatprep.subr.mxu0 0.0
    %164 = vmatpush1.msra.mxu0 0.0
    %165 = vmatprep.subr.mxu0 0.0
    %166 = vmatpush1.msra.mxu0 0.0
    %167 = vmatprep.subr.mxu0 0.0
    %168 = vmatpush1.msra.mxu0 0.0
    %169 = vmatprep.subr.mxu0 0.0
    %170 = vmatpush1.msra.mxu0 0.0
    %171 = vmatprep.subr.mxu0 0.0
    %172 = vmatpush1.msra.mxu0 0.0
    %173 = vmatprep.subr.mxu0 0.0
    %174 = vmatpush1.msra.mxu0 0.0
    %175 = vmatprep.subr.mxu0 0.0
    %176 = vmatpush1.msra.mxu0 0.0
    %177 = vmatprep.subr.mxu0 0.0
    %178 = vmatpush1.msra.mxu0 0.0
    %179 = vmatprep.subr.mxu0 0.0
    %180 = vmatpush1.msra.mxu0 0.0
    %181 = vmatprep.subr.mxu0 0.0
    %182 = vmatpush1.msra.mxu0 0.0
    %183 = vmatprep.subr.mxu0 0.0
    %184 = vmatpush1.msra.mxu0 0.0
    %185 = vmatprep.subr.mxu0 0.0
    %186 = vmatpush1.msra.mxu0 0.0
    %187 = vmatprep.subr.mxu0 0.0
    %188 = vmatpush1.msra.mxu0 0.0
    %189 = vmatprep.subr.mxu0 0.0
    %190 = vmatpush1.msra.mxu0 0.0
    %191 = vmatprep.subr.mxu0 0.0
    %192 = vmatpush1.msra.mxu0 0.0
    %193 = vmatprep.subr.mxu0 0.0
    %194 = vmatpush1.msra.mxu0 0.0
    %195 = vmatprep.subr.mxu0 0.0
    %196 = vmatpush1.msra.mxu0 0.0
    %197 = vmatprep.subr.mxu0 0.0
    %198 = vmatpush1.msra.mxu0 0.0
    %199 = vmatprep.subr.mxu0 0.0
    %200 = vmatpush1.msra.mxu0 0.0
    %201 = vmatprep.subr.mxu0 0.0
    %202 = vmatpush1.msra.mxu0 0.0
    %203 = vmatprep.subr.mxu0 0.0
    %204 = vmatpush1.msra.mxu0 0.0
    %205 = vmatprep.subr.mxu0 0.0
    %206 = vmatpush1.msra.mxu0 0.0
    %207 = vmatprep.subr.mxu0 0.0
    %208 = vmatpush1.msra.mxu0 0.0
    %209 = vmatprep.mubr.f32.mxu0 0.0
    %210 = vmatmul.mubr.f32.gmra.mrb[0].mxu0 %v47
    %v211 = vpop.f32.mrb[0].mxu0
    %v212 = vadd.f32 0.0, %v211
    %v213 = vpop.f32.mrb[0].mxu0
    %v214 = vadd.f32 0.0, %v213
    %215 = vdwg.mxu0
    %216 = vmatprep.subr.mxu0 %v18
    %217 = vmatpush1.msra.mxu0 %v17
    %218 = vmatprep.subr.mxu0 %v26
    %219 = vmatpush1.msra.mxu0 %v25
    %220 = vmatprep.subr.mxu0 %v34
    %221 = vmatpush1.msra.mxu0 %v33
    %222 = vmatprep.subr.mxu0 %v66
    %223 = vmatpush1.msra.mxu0 %v63
    %224 = vmatprep.subr.mxu0 0.0
    %225 = vmatpush1.msra.mxu0 0.0
    %226 = vmatprep.subr.mxu0 0.0
    %227 = vmatpush1.msra.mxu0 0.0
    %228 = vmatprep.subr.mxu0 0.0
    %229 = vmatpush1.msra.mxu0 0.0
    %230 = vmatprep.subr.mxu0 0.0
    %231 = vmatpush1.msra.mxu0 0.0
    %232 = vmatprep.subr.mxu0 0.0
    %233 = vmatpush1.msra.mxu0 0.0
    %234 = vmatprep.subr.mxu0 0.0
    %235 = vmatpush1.msra.mxu0 0.0
    %236 = vmatprep.subr.mxu0 0.0
    %237 = vmatpush1.msra.mxu0 0.0
    %238 = vmatprep.subr.mxu0 0.0
    %239 = vmatpush1.msra.mxu0 0.0
    %240 = vmatprep.subr.mxu0 0.0
    %241 = vmatpush1.msra.mxu0 0.0
    %242 = vmatprep.subr.mxu0 0.0
    %243 = vmatpush1.msra.mxu0 0.0
    %244 = vmatprep.subr.mxu0 0.0
    %245 = vmatpush1.msra.mxu0 0.0
    %246 = vmatprep.subr.mxu0 0.0
    %247 = vmatpush1.msra.mxu0 0.0
    %248 = vmatprep.subr.mxu0 0.0
    %249 = vmatpush1.msra.mxu0 0.0
    %250 = vmatprep.subr.mxu0 0.0
    %251 = vmatpush1.msra.mxu0 0.0
    %252 = vmatprep.subr.mxu0 0.0
    %253 = vmatpush1.msra.mxu0 0.0
    %254 = vmatprep.subr.mxu0 0.0
    %255 = vmatpush1.msra.mxu0 0.0
    %256 = vmatprep.subr.mxu0 0.0
    %257 = vmatpush1.msra.mxu0 0.0
    %258 = vmatprep.subr.mxu0 0.0
    %259 = vmatpush1.msra.mxu0 0.0
    %260 = vmatprep.subr.mxu0 0.0
    %261 = vmatpush1.msra.mxu0 0.0
    %262 = vmatprep.subr.mxu0 0.0
    %263 = vmatpush1.msra.mxu0 0.0
    %264 = vmatprep.subr.mxu0 0.0
    %265 = vmatpush1.msra.mxu0 0.0
    %266 = vmatprep.subr.mxu0 0.0
    %267 = vmatpush1.msra.mxu0 0.0
    %268 = vmatprep.subr.mxu0 0.0
    %269 = vmatpush1.msra.mxu0 0.0
    %270 = vmatprep.subr.mxu0 0.0
    %271 = vmatpush1.msra.mxu0 0.0
    %272 = vmatprep.subr.mxu0 0.0
    %273 = vmatpush1.msra.mxu0 0.0
    %274 = vmatprep.subr.mxu0 0.0
    %275 = vmatpush1.msra.mxu0 0.0
    %276 = vmatprep.subr.mxu0 0.0
    %277 = vmatpush1.msra.mxu0 0.0
    %278 = vmatprep.subr.mxu0 0.0
    %279 = vmatpush1.msra.mxu0 0.0
    %280 = vmatprep.mubr.f32.mxu0 0.0
    %281 = vmatmul.mubr.f32.gmra.mrb[0].mxu0 %v47
    %v282 = vpop.f32.mrb[0].mxu0
    %v283 = vadd.f32 0.0, %v282
    %v284 = vpop.f32.mrb[0].mxu0
    %v285 = vadd.f32 0.0, %v284
    %286 = vdwg.mxu0
    %287 = vmatprep.subr.mxu0 %v20
    %288 = vmatpush1.msra.mxu0 %v19
    %289 = vmatprep.subr.mxu0 %v28
    %290 = vmatpush1.msra.mxu0 %v27
    %291 = vmatprep.subr.mxu0 %v36
    %292 = vmatpush1.msra.mxu0 %v35
    %293 = vmatprep.subr.mxu0 %v72
    %294 = vmatpush1.msra.mxu0 %v69
    %295 = vmatprep.subr.mxu0 0.0
    %296 = vmatpush1.msra.mxu0 0.0
    %297 = vmatprep.subr.mxu0 0.0
    %298 = vmatpush1.msra.mxu0 0.0
    %299 = vmatprep.subr.mxu0 0.0
    %300 = vmatpush1.msra.mxu0 0.0
    %301 = vmatprep.subr.mxu0 0.0
    %302 = vmatpush1.msra.mxu0 0.0
    %303 = vmatprep.subr.mxu0 0.0
    %304 = vmatpush1.msra.mxu0 0.0
    %305 = vmatprep.subr.mxu0 0.0
    %306 = vmatpush1.msra.mxu0 0.0
    %307 = vmatprep.subr.mxu0 0.0
    %308 = vmatpush1.msra.mxu0 0.0
    %309 = vmatprep.subr.mxu0 0.0
    %310 = vmatpush1.msra.mxu0 0.0
    %311 = vmatprep.subr.mxu0 0.0
    %312 = vmatpush1.msra.mxu0 0.0
    %313 = vmatprep.subr.mxu0 0.0
    %314 = vmatpush1.msra.mxu0 0.0
    %315 = vmatprep.subr.mxu0 0.0
    %316 = vmatpush1.msra.mxu0 0.0
    %317 = vmatprep.subr.mxu0 0.0
    %318 = vmatpush1.msra.mxu0 0.0
    %319 = vmatprep.subr.mxu0 0.0
    %320 = vmatpush1.msra.mxu0 0.0
    %321 = vmatprep.subr.mxu0 0.0
    %322 = vmatpush1.msra.mxu0 0.0
    %323 = vmatprep.subr.mxu0 0.0
    %324 = vmatpush1.msra.mxu0 0.0
    %325 = vmatprep.subr.mxu0 0.0
    %326 = vmatpush1.msra.mxu0 0.0
    %327 = vmatprep.subr.mxu0 0.0
    %328 = vmatpush1.msra.mxu0 0.0
    %329 = vmatprep.subr.mxu0 0.0
    %330 = vmatpush1.msra.mxu0 0.0
    %331 = vmatprep.subr.mxu0 0.0
    %332 = vmatpush1.msra.mxu0 0.0
    %333 = vmatprep.subr.mxu0 0.0
    %334 = vmatpush1.msra.mxu0 0.0
    %335 = vmatprep.subr.mxu0 0.0
    %336 = vmatpush1.msra.mxu0 0.0
    %337 = vmatprep.subr.mxu0 0.0
    %338 = vmatpush1.msra.mxu0 0.0
    %339 = vmatprep.subr.mxu0 0.0
    %340 = vmatpush1.msra.mxu0 0.0
    %341 = vmatprep.subr.mxu0 0.0
    %342 = vmatpush1.msra.mxu0 0.0
    %343 = vmatprep.subr.mxu0 0.0
    %344 = vmatpush1.msra.mxu0 0.0
    %345 = vmatprep.subr.mxu0 0.0
    %346 = vmatpush1.msra.mxu0 0.0
    %347 = vmatprep.subr.mxu0 0.0
    %348 = vmatpush1.msra.mxu0 0.0
    %349 = vmatprep.subr.mxu0 0.0
    %350 = vmatpush1.msra.mxu0 0.0
    %351 = vmatprep.mubr.f32.mxu0 0.0
    %352 = vmatmul.mubr.f32.gmra.mrb[0].mxu0 %v47
    %v353 = vpop.f32.mrb[0].mxu0
    %v354 = vadd.f32 0.0, %v353
    %v355 = vpop.f32.mrb[0].mxu0
    %v356 = vadd.f32 0.0, %v355
    %357 = vdwg.mxu0
    %v358 = vmax.f32 %v141, 0.0
    %v359 = vmax.f32 %v143, 0.0
    %v360 = vmax.f32 %v212, 0.0
    %v361 = vmax.f32 %v214, 0.0
    %v362 = vmax.f32 %v283, 0.0
    %v363 = vmax.f32 %v285, 0.0
    %v364 = vmax.f32 %v354, 0.0
    %v365 = vmax.f32 %v356, 0.0
    %v366 = vadd.f32 %v358, %v359
    %367 = vadd.xlane.f32.xlu0 %v366
    %v368 = vpop.xlane.xlu0 %367
    %v369 = vmul.f32 %v368, 0.00390625
    %v370 = vadd.f32 %v360, %v361
    %371 = vadd.xlane.f32.xlu0 %v370
    %v372 = vpop.xlane.xlu0 %371
    %v373 = vmul.f32 %v372, 0.00390625
    %v374 = vadd.f32 %v362, %v363
    %375 = vadd.xlane.f32.xlu0 %v374
    %v376 = vpop.xlane.xlu0 %375
    %v377 = vmul.f32 %v376, 0.00390625
    %v378 = vadd.f32 %v364, %v365
    %379 = vadd.xlane.f32.xlu0 %v378
    %v380 = vpop.xlane.xlu0 %379
    %v381 = vmul.f32 %v380, 0.00390625
    %v382 = vmul.f32 %v12, %v369
    %vm383 = vcmask 244960
    %v384 = vsel %vm383, %v382, 0.0
    %v385 = vrot.slane %v384, 4
    %v386 = vadd.f32 %v384, %v385
    %v387 = vrot.slane %v386, 2
    %v388 = vadd.f32 %v386, %v387
    %v389 = vrot.slane %v388, 1
    %v390 = vadd.f32 %v388, %v389
    %v391 = vmul.f32 %v12, %v377
    %vm392 = vcmask 261360
    %v393 = vsel %vm392, %v391, 0.0
    %v394 = vrot.slane %v393, 4
    %v395 = vadd.f32 %v393, %v394
    %v396 = vrot.slane %v395, 2
    %v397 = vadd.f32 %v395, %v396
    %v398 = vrot.slane %v397, 1
    %v399 = vadd.f32 %v397, %v398
    %401 = vrot.lane.b32.xlu0 %v399, 126
    %v402 = vpop.permute.xlu0 %401
    %v404 = vadd.f32 %v390, %v402
    %405 = vrot.lane.b32.xlu0 %v12, 124
    %v406 = vpop.permute.xlu0 %405
    %v408 = vadd.f32 %v404, %v406
    %v409 = vmul.f32 %v12, %v373
    %v410 = vsel %vm383, %v409, 0.0
    %v411 = vrot.slane %v410, 4
    %v412 = vadd.f32 %v410, %v411
    %v413 = vrot.slane %v412, 2
    %v414 = vadd.f32 %v412, %v413
    %v415 = vrot.slane %v414, 1
    %v416 = vadd.f32 %v414, %v415
    %v417 = vmul.f32 %v12, %v381
    %v418 = vsel %vm392, %v417, 0.0
    %v419 = vrot.slane %v418, 4
    %v420 = vadd.f32 %v418, %v419
    %v421 = vrot.slane %v420, 2
    %v422 = vadd.f32 %v420, %v421
    %v423 = vrot.slane %v422, 1
    %v424 = vadd.f32 %v422, %v423
    %426 = vrot.lane.b32.xlu0 %v424, 126
    %v427 = vpop.permute.xlu0 %426
    %v429 = vadd.f32 %v416, %v427
    %v430 = vadd.f32 %v429, %v406
    %v432 = vrot.slane %v430, 7
    %vm434 = vcmask 1040384
    %v435 = vsel %vm434, %v408, %v432
    %437 = vrot.lane.b32.xlu0 %v435, 100
    %v438 = vpop.permute.xlu0 %437
    %vm440 = vcmask 9216
    %441 = vst.msk [vmem:[#allocation2] sm:$0x3] %vm440, %v438
    // Predicated region
    $region10: #{onnx_compatible_forward.1} parent=1 // pred_check
      _
    $region11: #{onnx_compatible_forward.1} parent=1 // pred_check_branch
      %443 = sbr.rel (0) target = $region13
    $region12: #{onnx_compatible_forward.1} parent=1 // pred_region
      %s445 = ssub.s32 32, 32
      %446 = vsyncadd [#allocation3], %s445
      %s448 = sshll.u32 [#allocation2], 4
      %s449 = int_to_ptr.vmem [resolvable:$true] %s448
      %451 = dma.vmem_to_hbm [thread:$0]  %s449, 32, %s2, [#allocation3]
    $region13: #{onnx_compatible_forward.1} parent=1 // pred_fallthru
      _
    // Predicated region
    $region14: #{onnx_compatible_forward.1} parent=1 // pred_check
      _
    $region15: #{onnx_compatible_forward.1} parent=1 // pred_check_branch
      %453 = sbr.rel (0) target = $region17
    $region16: #{onnx_compatible_forward.1} parent=1 // pred_region
      %454 = dma.done [#allocation3], 32
    $region17: #{onnx_compatible_forward.1} parent=1 // pred_fallthru
      _
    %455 = vsyncpa [#allocation3], 1

</llo_original>
